<compile_context>
chip_gen: v5e
topology: v5e:2x2
jax: 0.10.0
libtpu: 0.0.40
codegen_flags: <defaults>
</compile_context>

<pallas_src>
from functools import partial

import jax
import jax.numpy as jnp
from jax.experimental import pallas as pl
from jax.experimental.pallas import tpu as pltpu  # noqa: F401  (kept for optional tuning)


def conv_bn_relu_kernel(p_ref, w_ref, scale_ref, shift_ref, o_ref):
    """Fused im2col-matmul conv + BN(eval) + ReLU in one MXU step.

    p_ref:     (M_pad, K_pad)    bf16 im2col patches (K_pad lane-aligned, zeros past K)
    w_ref:     (K_pad, Cout_pad) bf16 conv weights, un-scaled
    scale_ref: (1, Cout_pad)     f32 BN scale  = gamma / sqrt(var + eps)
    shift_ref: (1, Cout_pad)     f32 shift     = scale * (conv_bias - mean) + beta
    o_ref:     (M_pad, Cout_pad) bf16 output (lane-dense, unmasked stores)
    """
    acc = jnp.dot(p_ref[...], w_ref[...], preferred_element_type=jnp.float32)
    y = jnp.maximum(acc * scale_ref[...] + shift_ref[...], 0.0)
    o_ref[...] = y.astype(o_ref.dtype)


@partial(jax.jit, static_argnames=("padding", "eps"))
def conv_bn_relu(x_nchw, w_oihw, conv_bias, gamma, beta, running_mean,
                 running_var, *, padding=1, eps=1e-5):
    N, Cin, H, W = x_nchw.shape
    Cout, Cin_w, KH, KW = w_oihw.shape
    assert Cin == Cin_w, "groups != 1 not supported"

    H_out = H + 2 * padding - KH + 1
    W_out = W + 2 * padding - KW + 1
    K = KH * KW * Cin
    M = N * H_out * W_out

    K_pad = ((K + 127) // 128) * 128          # lane-aligned contraction dim
    Cout_pad = ((Cout + 127) // 128) * 128    # lane-dense output
    M_pad = ((M + 7) // 8) * 8                # sublane-aligned rows

    # ---- im2col as ONE XLA op: identity-filter conv -> (N, H_out, W_out, K_pad).
    # Output feature f < K selects input element (cin, kh, kw) = unravel(f);
    # features f >= K are zero, folding the K -> K_pad padding into the same op.
    x_bf = x_nchw.astype(jnp.bfloat16)
    patch_filter = jnp.eye(K_pad, K, dtype=jnp.bfloat16).reshape(K_pad, Cin, KH, KW)
    patches = jax.lax.conv_general_dilated(
        x_bf, patch_filter, window_strides=(1, 1),
        padding=((padding, padding), (padding, padding)),
        dimension_numbers=("NCHW", "OIHW", "NHWC"))
    patches = patches.reshape(M, K_pad)
    if M_pad != M:
        # Padded rows compute relu(shift) garbage; they are sliced off below.
        patches = jnp.pad(patches, ((0, M_pad - M), (0, 0)))

    # ---- weights / BN params (tiny; fused under jit). Scale stays out of the
    # bf16 weights and is applied on the f32 accumulator in the kernel epilogue.
    w_mat = jnp.transpose(w_oihw.reshape(Cout, K))            # (K, Cout), rows = (cin,kh,kw)
    w_mat = jnp.pad(w_mat, ((0, K_pad - K), (0, Cout_pad - Cout))).astype(jnp.bfloat16)
    scale = (gamma * jax.lax.rsqrt(running_var + eps)).astype(jnp.float32)     # (Cout,)
    shift = (scale * (conv_bias - running_mean) + beta).astype(jnp.float32)    # (Cout,)
    scale_row = jnp.pad(scale.reshape(1, Cout), ((0, 0), (0, Cout_pad - Cout)))
    shift_row = jnp.pad(shift.reshape(1, Cout), ((0, 0), (0, Cout_pad - Cout)))

    # ---- single-step pallas_call: everything fits in VMEM on v5e/v6e/v7x.
    out2d = pl.pallas_call(
        conv_bn_relu_kernel,
        out_shape=jax.ShapeDtypeStruct((M_pad, Cout_pad), jnp.bfloat16),
        grid=(1,),
        in_specs=[
            pl.BlockSpec((M_pad, K_pad), lambda i: (0, 0)),
            pl.BlockSpec((K_pad, Cout_pad), lambda i: (0, 0)),
            pl.BlockSpec((1, Cout_pad), lambda i: (0, 0)),
            pl.BlockSpec((1, Cout_pad), lambda i: (0, 0)),
        ],
        out_specs=pl.BlockSpec((M_pad, Cout_pad), lambda i: (0, 0)),
    )(patches, w_mat, scale_row, shift_row)

    # Back to the module's NCHW / input-dtype contract (returning NHWC bf16
    # directly would save this relayout, but the module returns NCHW float).
    out = out2d[:M, :Cout].reshape(N, H_out, W_out, Cout)
    return jnp.transpose(out, (0, 3, 1, 2)).astype(x_nchw.dtype)


def _reference(x_nchw, w_oihw, conv_bias, gamma, beta, running_mean, running_var,
               *, padding=1, eps=1e-5):
    conv = jax.lax.conv_general_dilated(
        x_nchw, w_oihw, window_strides=(1, 1),
        padding=((padding, padding), (padding, padding)),
        dimension_numbers=("NCHW", "OIHW", "NCHW"),
        precision=jax.lax.Precision.HIGHEST,
    ) + conv_bias[None, :, None, None]
    bn = (conv - running_mean[None, :, None, None]) / jnp.sqrt(
        running_var[None, :, None, None] + eps)
    bn = bn * gamma[None, :, None, None] + beta[None, :, None, None]
    return jnp.maximum(bn, 0.0)


if __name__ == "__main__":
    # Shapes consistent with the module: batch=2, Cin=4, Cout=8, 16x16,
    # kernel_size=3, stride=1, padding=1, bias=True.
    N, Cin, Cout, H, W, Ksz = 2, 4, 8, 16, 16, 3

    key = jax.random.PRNGKey(0)
    kx, kw, kb, kg, kbe, krm, krv = jax.random.split(key, 7)

    x = jax.random.normal(kx, (N, Cin, H, W), dtype=jnp.float32)
    w = jax.random.normal(kw, (Cout, Cin, Ksz, Ksz), dtype=jnp.float32) * 0.1
    conv_bias = jax.random.normal(kb, (Cout,), dtype=jnp.float32) * 0.1
    gamma = jax.random.uniform(kg, (Cout,), dtype=jnp.float32, minval=0.5, maxval=1.5)
    beta = jax.random.normal(kbe, (Cout,), dtype=jnp.float32) * 0.1
    running_mean = jax.random.normal(krm, (Cout,), dtype=jnp.float32) * 0.1
    running_var = jax.random.uniform(krv, (Cout,), dtype=jnp.float32,
                                     minval=0.5, maxval=1.5)

    out = conv_bn_relu(x, w, conv_bias, gamma, beta, running_mean, running_var,
                       padding=1)
    out = jax.block_until_ready(out)

    ref = _reference(x, w, conv_bias, gamma, beta, running_mean, running_var,
                     padding=1)
    assert out.shape == (N, Cout, H, W)
    # Tolerance accounts for bf16 MXU operands and bf16 output (f32 accumulation,
    # f32 BN/ReLU epilogue).
    max_err = float(jnp.max(jnp.abs(out - ref)))
    assert max_err < 5e-2, f"mismatch vs reference: max abs err {max_err}"

    print("KERNEL_OK")
</pallas_src>

<mosaic_0001>
module attributes {stable_mosaic.version = 11 : i64} {
  func.func @conv_bn_relu_kernel(%arg0: i32, %arg1: memref<512x128xbf16, #tpu.memory_space<vmem>>, %arg2: memref<128x128xbf16, #tpu.memory_space<vmem>>, %arg3: memref<1x128xf32, #tpu.memory_space<vmem>>, %arg4: memref<1x128xf32, #tpu.memory_space<vmem>>, %arg5: memref<512x128xbf16, #tpu.memory_space<vmem>>) attributes {dimension_semantics = [#tpu.dimension_semantics<arbitrary>], iteration_bounds = array<i64: 1>, scalar_prefetch = 0 : i64, scratch_operands = 0 : i64, tpu.core_type = #tpu.core_type<tc>, window_params = [{pipeline_mode = #tpu.pipeline_mode<synchronous>, transform_indices = @transform_0, window_bounds = array<i64: 512, 128>}, {pipeline_mode = #tpu.pipeline_mode<synchronous>, transform_indices = @transform_1, window_bounds = array<i64: 128, 128>}, {pipeline_mode = #tpu.pipeline_mode<synchronous>, transform_indices = @transform_2, window_bounds = array<i64: 1, 128>}, {pipeline_mode = #tpu.pipeline_mode<synchronous>, transform_indices = @transform_3, window_bounds = array<i64: 1, 128>}, {pipeline_mode = #tpu.pipeline_mode<synchronous>, transform_indices = @transform_4, window_bounds = array<i64: 512, 128>}]} {
    %c0 = arith.constant 0 : index
    %c0_0 = arith.constant 0 : index
    %0 = vector.load %arg1[%c0, %c0_0] : memref<512x128xbf16, #tpu.memory_space<vmem>>, vector<512x128xbf16>
    %c0_1 = arith.constant 0 : index
    %c0_2 = arith.constant 0 : index
    %1 = vector.load %arg2[%c0_1, %c0_2] : memref<128x128xbf16, #tpu.memory_space<vmem>>, vector<128x128xbf16>
    %cst = arith.constant dense<0.000000e+00> : vector<512x128xf32>
    %2 = tpu.matmul %0, %1, %cst {dimension_numbers = #tpu.dot_dimension_numbers<[1], [0], [0], [1], [0, 0, 1, 1], [], []>} : vector<512x128xbf16>, vector<128x128xbf16>, vector<512x128xf32> -> vector<512x128xf32>
    %c0_3 = arith.constant 0 : index
    %c0_4 = arith.constant 0 : index
    %3 = vector.load %arg3[%c0_3, %c0_4] : memref<1x128xf32, #tpu.memory_space<vmem>>, vector<1x128xf32>
    %4 = vector.broadcast %3 : vector<1x128xf32> to vector<512x128xf32>
    %5 = arith.mulf %2, %4 : vector<512x128xf32>
    %c0_5 = arith.constant 0 : index
    %c0_6 = arith.constant 0 : index
    %6 = vector.load %arg4[%c0_5, %c0_6] : memref<1x128xf32, #tpu.memory_space<vmem>>, vector<1x128xf32>
    %7 = vector.broadcast %6 : vector<1x128xf32> to vector<512x128xf32>
    %8 = arith.addf %5, %7 : vector<512x128xf32>
    %cst_7 = arith.constant 0.000000e+00 : f32
    %9 = vector.broadcast %cst_7 : f32 to vector<512x128xf32>
    %10 = arith.maximumf %8, %9 : vector<512x128xf32>
    %11 = arith.truncf %10 : vector<512x128xf32> to vector<512x128xbf16>
    %c0_8 = arith.constant 0 : index
    %c0_9 = arith.constant 0 : index
    %12 = vector.load %arg5[%c0_8, %c0_9] : memref<512x128xbf16, #tpu.memory_space<vmem>>, vector<512x128xbf16>
    tpu.vector_store %arg5[%c0_8, %c0_9], %11 {strides = array<i32>} : memref<512x128xbf16, #tpu.memory_space<vmem>>, vector<512x128xbf16>,
    return
  }
  func.func @transform_0(%arg0: i32) -> (i32, i32) {
    %c0_i32 = arith.constant 0 : i32
    %c0_i32_0 = arith.constant 0 : i32
    %c0_i32_1 = arith.constant 0 : i32
    return %c0_i32, %c0_i32_0 : i32, i32
  }
  func.func @transform_1(%arg0: i32) -> (i32, i32) {
    %c0_i32 = arith.constant 0 : i32
    %c0_i32_0 = arith.constant 0 : i32
    %c0_i32_1 = arith.constant 0 : i32
    return %c0_i32, %c0_i32_0 : i32, i32
  }
  func.func @transform_2(%arg0: i32) -> (i32, i32) {
    %c0_i32 = arith.constant 0 : i32
    %c0_i32_0 = arith.constant 0 : i32
    %c0_i32_1 = arith.constant 0 : i32
    return %c0_i32, %c0_i32_0 : i32, i32
  }
  func.func @transform_3(%arg0: i32) -> (i32, i32) {
    %c0_i32 = arith.constant 0 : i32
    %c0_i32_0 = arith.constant 0 : i32
    %c0_i32_1 = arith.constant 0 : i32
    return %c0_i32, %c0_i32_0 : i32, i32
  }
  func.func @transform_4(%arg0: i32) -> (i32, i32) {
    %c0_i32 = arith.constant 0 : i32
    %c0_i32_0 = arith.constant 0 : i32
    %c0_i32_1 = arith.constant 0 : i32
    return %c0_i32, %c0_i32_0 : i32, i32
  }
}

</mosaic_0001>

<llo_original>
// kernel: conv_bn_relu.1
$region0: #{conv_bn_relu.1}
  #allocation0 [shape = 'u32[]', space=smem, size = 0x4, offset = 0x4, fixed_abs, tag = 'smem constant byte address 0x4 - core index']
  #allocation1 [shape = 'u32[72,128]{1,0:T(1,128)}', space=vmem, size = 0x9000, scoped, tag = 'internal scratch']
  %s0 = inlined_call_operand.vmem [shape: bf16[512,128], index: 0, kind: input, shape index: {}]
  %s1 = inlined_call_operand.vmem [shape: bf16[128,128], index: 1, kind: input, shape index: {}]
  %s2 = inlined_call_operand.vmem [shape: f32[1,128], index: 2, kind: input, shape index: {}]
  %s3 = inlined_call_operand.vmem [shape: f32[1,128], index: 3, kind: input, shape index: {}]
  %s4 = inlined_call_operand.vmem [shape: bf16[512,128], index: 4, kind: output, shape index: {}]
  %s5 = sld [smem:[#allocation0]]
  $region26: #{conv_bn_relu.1} parent=0
    _
  %s7 = ssub.s32 1, %s5
  %s8 = scalar_select 0, %s7, %s5
  // Predicated region
  $region2: #{conv_bn_relu.1} parent=0 // pred_check
    _
  $region3: #{conv_bn_relu.1} parent=0 // pred_check_branch
    %10 = sbr.rel (0) target = $region5
  $region4: #{conv_bn_relu.1} parent=0 // pred_region
    _
  $region5: #{conv_bn_relu.1} parent=0 // pred_fallthru
    _
  // Predicated region
  $region6: #{conv_bn_relu.1} parent=0 // pred_check
    _
  $region7: #{conv_bn_relu.1} parent=0 // pred_check_branch
    %12 = sbr.rel (0) target = $region9
  $region8: #{conv_bn_relu.1} parent=0 // pred_region
    _
  $region9: #{conv_bn_relu.1} parent=0 // pred_fallthru
    _
  // Predicated region
  $region10: #{conv_bn_relu.1} parent=0 // pred_check
    _
  $region11: #{conv_bn_relu.1} parent=0 // pred_check_branch
    %14 = sbr.rel (0) target = $region13
  $region12: #{conv_bn_relu.1} parent=0 // pred_region
    _
  $region13: #{conv_bn_relu.1} parent=0 // pred_fallthru
    _
  // Predicated region
  $region14: #{conv_bn_relu.1} parent=0 // pred_check
    _
  $region15: #{conv_bn_relu.1} parent=0 // pred_check_branch
    %16 = sbr.rel (0) target = $region17
  $region16: #{conv_bn_relu.1} parent=0 // pred_region
    _
  $region17: #{conv_bn_relu.1} parent=0 // pred_fallthru
    _
  %v17 = vld [vmem:[%s0] sm:$0xf]
  %v18 = vld [vmem:[%s0 + $0x4] sm:$0xf]
  %v19 = vld [vmem:[%s0 + $0x8] sm:$0xf]
  %v20 = vld [vmem:[%s0 + $0xc] sm:$0xf]
  %v21 = vld [vmem:[%s0 + $0x10] sm:$0xf]
  %v22 = vld [vmem:[%s0 + $0x14] sm:$0xf]
  %v23 = vld [vmem:[%s0 + $0x18] sm:$0xf]
  %v24 = vld [vmem:[%s0 + $0x1c] sm:$0xf]
  %v25 = vld [vmem:[%s0 + $0x20] sm:$0xf]
  %v26 = vld [vmem:[%s0 + $0x24] sm:$0xf]
  %v27 = vld [vmem:[%s0 + $0x28] sm:$0xf]
  %v28 = vld [vmem:[%s0 + $0x2c] sm:$0xf]
  %v29 = vld [vmem:[%s0 + $0x30] sm:$0xf]
  %v30 = vld [vmem:[%s0 + $0x34] sm:$0xf]
  %v31 = vld [vmem:[%s0 + $0x38] sm:$0xf]
  %v32 = vld [vmem:[%s0 + $0x3c] sm:$0xf]
  %v33 = vld [vmem:[%s0 + $0x40] sm:$0xf]
  %v34 = vld [vmem:[%s0 + $0x44] sm:$0xf]
  %v35 = vld [vmem:[%s0 + $0x48] sm:$0xf]
  %v36 = vld [vmem:[%s0 + $0x4c] sm:$0xf]
  %v37 = vld [vmem:[%s0 + $0x50] sm:$0xf]
  %v38 = vld [vmem:[%s0 + $0x54] sm:$0xf]
  %v39 = vld [vmem:[%s0 + $0x58] sm:$0xf]
  %v40 = vld [vmem:[%s0 + $0x5c] sm:$0xf]
  %v41 = vld [vmem:[%s0 + $0x60] sm:$0xf]
  %v42 = vld [vmem:[%s0 + $0x64] sm:$0xf]
  %v43 = vld [vmem:[%s0 + $0x68] sm:$0xf]
  %v44 = vld [vmem:[%s0 + $0x6c] sm:$0xf]
  %v45 = vld [vmem:[%s0 + $0x70] sm:$0xf]
  %v46 = vld [vmem:[%s0 + $0x74] sm:$0xf]
  %v47 = vld [vmem:[%s0 + $0x78] sm:$0xf]
  %v48 = vld [vmem:[%s0 + $0x7c] sm:$0xf]
  %v49 = vld [vmem:[%s0 + $0x80] sm:$0xf]
  %v50 = vld [vmem:[%s0 + $0x84] sm:$0xf]
  %v51 = vld [vmem:[%s0 + $0x88] sm:$0xf]
  %v52 = vld [vmem:[%s0 + $0x8c] sm:$0xf]
  %v53 = vld [vmem:[%s0 + $0x90] sm:$0xf]
  %v54 = vld [vmem:[%s0 + $0x94] sm:$0xf]
  %v55 = vld [vmem:[%s0 + $0x98] sm:$0xf]
  %v56 = vld [vmem:[%s0 + $0x9c] sm:$0xf]
  %v57 = vld [vmem:[%s0 + $0xa0] sm:$0xf]
  %v58 = vld [vmem:[%s0 + $0xa4] sm:$0xf]
  %v59 = vld [vmem:[%s0 + $0xa8] sm:$0xf]
  %v60 = vld [vmem:[%s0 + $0xac] sm:$0xf]
  %v61 = vld [vmem:[%s0 + $0xb0] sm:$0xf]
  %v62 = vld [vmem:[%s0 + $0xb4] sm:$0xf]
  %v63 = vld [vmem:[%s0 + $0xb8] sm:$0xf]
  %v64 = vld [vmem:[%s0 + $0xbc] sm:$0xf]
  %v65 = vld [vmem:[%s0 + $0xc0] sm:$0xf]
  %v66 = vld [vmem:[%s0 + $0xc4] sm:$0xf]
  %v67 = vld [vmem:[%s0 + $0xc8] sm:$0xf]
  %v68 = vld [vmem:[%s0 + $0xcc] sm:$0xf]
  %v69 = vld [vmem:[%s0 + $0xd0] sm:$0xf]
  %v70 = vld [vmem:[%s0 + $0xd4] sm:$0xf]
  %v71 = vld [vmem:[%s0 + $0xd8] sm:$0xf]
  %v72 = vld [vmem:[%s0 + $0xdc] sm:$0xf]
  %v73 = vld [vmem:[%s0 + $0xe0] sm:$0xf]
  %v74 = vld [vmem:[%s0 + $0xe4] sm:$0xf]
  %v75 = vld [vmem:[%s0 + $0xe8] sm:$0xf]
  %v76 = vld [vmem:[%s0 + $0xec] sm:$0xf]
  %v77 = vld [vmem:[%s0 + $0xf0] sm:$0xf]
  %v78 = vld [vmem:[%s0 + $0xf4] sm:$0xf]
  %v79 = vld [vmem:[%s0 + $0xf8] sm:$0xf]
  %v80 = vld [vmem:[%s0 + $0xfc] sm:$0xf]
  %v81 = vld [vmem:[%s1] sm:$0xf]
  %v82 = vld [vmem:[%s1 + $0x4] sm:$0xf]
  %v83 = vld [vmem:[%s1 + $0x8] sm:$0xf]
  %v84 = vld [vmem:[%s1 + $0xc] sm:$0xf]
  %v85 = vld [vmem:[%s1 + $0x10] sm:$0xf]
  %v86 = vld [vmem:[%s1 + $0x14] sm:$0xf]
  %v87 = vld [vmem:[%s1 + $0x18] sm:$0xf]
  %v88 = vld [vmem:[%s1 + $0x1c] sm:$0xf]
  %v89 = vld [vmem:[%s1 + $0x20] sm:$0xf]
  %v90 = vld [vmem:[%s1 + $0x24] sm:$0xf]
  %v91 = vld [vmem:[%s1 + $0x28] sm:$0xf]
  %v92 = vld [vmem:[%s1 + $0x2c] sm:$0xf]
  %v93 = vld [vmem:[%s1 + $0x30] sm:$0xf]
  %v94 = vld [vmem:[%s1 + $0x34] sm:$0xf]
  %v95 = vld [vmem:[%s1 + $0x38] sm:$0xf]
  %v96 = vld [vmem:[%s1 + $0x3c] sm:$0xf]
  %v161 = vunpack.c.l.b16 %v17
  %v162 = vunpack.c.l.b16 %v18
  %v163 = vunpack.c.l.b16 %v19
  %v164 = vunpack.c.l.b16 %v20
  %v165 = vunpack.c.l.b16 %v21
  %v166 = vunpack.c.l.b16 %v22
  %v167 = vunpack.c.l.b16 %v23
  %v168 = vunpack.c.l.b16 %v24
  %v169 = vunpack.c.l.b16 %v25
  %v170 = vunpack.c.l.b16 %v26
  %v171 = vunpack.c.l.b16 %v27
  %v172 = vunpack.c.l.b16 %v28
  %v173 = vunpack.c.l.b16 %v29
  %v174 = vunpack.c.l.b16 %v30
  %v175 = vunpack.c.l.b16 %v31
  %v176 = vunpack.c.l.b16 %v32
  %v177 = vunpack.c.l.b16 %v33
  %v178 = vunpack.c.l.b16 %v34
  %v179 = vunpack.c.l.b16 %v35
  %v180 = vunpack.c.l.b16 %v36
  %v181 = vunpack.c.l.b16 %v37
  %v182 = vunpack.c.l.b16 %v38
  %v183 = vunpack.c.l.b16 %v39
  %v184 = vunpack.c.l.b16 %v40
  %v185 = vunpack.c.l.b16 %v41
  %v186 = vunpack.c.l.b16 %v42
  %v187 = vunpack.c.l.b16 %v43
  %v188 = vunpack.c.l.b16 %v44
  %v189 = vunpack.c.l.b16 %v45
  %v190 = vunpack.c.l.b16 %v46
  %v191 = vunpack.c.l.b16 %v47
  %v192 = vunpack.c.l.b16 %v48
  %v193 = vunpack.c.l.b16 %v49
  %v194 = vunpack.c.l.b16 %v50
  %v195 = vunpack.c.l.b16 %v51
  %v196 = vunpack.c.l.b16 %v52
  %v197 = vunpack.c.l.b16 %v53
  %v198 = vunpack.c.l.b16 %v54
  %v199 = vunpack.c.l.b16 %v55
  %v200 = vunpack.c.l.b16 %v56
  %v201 = vunpack.c.l.b16 %v57
  %v202 = vunpack.c.l.b16 %v58
  %v203 = vunpack.c.l.b16 %v59
  %v204 = vunpack.c.l.b16 %v60
  %v205 = vunpack.c.l.b16 %v61
  %v206 = vunpack.c.l.b16 %v62
  %v207 = vunpack.c.l.b16 %v63
  %v208 = vunpack.c.l.b16 %v64
  %v209 = vunpack.c.l.b16 %v65
  %v210 = vunpack.c.l.b16 %v66
  %v211 = vunpack.c.l.b16 %v67
  %v212 = vunpack.c.l.b16 %v68
  %v213 = vunpack.c.l.b16 %v69
  %v214 = vunpack.c.l.b16 %v70
  %v215 = vunpack.c.l.b16 %v71
  %v216 = vunpack.c.l.b16 %v72
  %v217 = vunpack.c.l.b16 %v73
  %v218 = vunpack.c.l.b16 %v74
  %v219 = vunpack.c.l.b16 %v75
  %v220 = vunpack.c.l.b16 %v76
  %v221 = vunpack.c.l.b16 %v77
  %v222 = vunpack.c.l.b16 %v78
  %v223 = vunpack.c.l.b16 %v79
  %v224 = vunpack.c.l.b16 %v80
  %v225 = vpack.c.b16 %v162, %v161
  %v226 = vpack.c.b16 %v164, %v163
  %v227 = vpack.c.b16 %v166, %v165
  %v228 = vpack.c.b16 %v168, %v167
  %v229 = vpack.c.b16 %v170, %v169
  %v230 = vpack.c.b16 %v172, %v171
  %v231 = vpack.c.b16 %v174, %v173
  %v232 = vpack.c.b16 %v176, %v175
  %v233 = vpack.c.b16 %v178, %v177
  %v234 = vpack.c.b16 %v180, %v179
  %v235 = vpack.c.b16 %v182, %v181
  %v236 = vpack.c.b16 %v184, %v183
  %v237 = vpack.c.b16 %v186, %v185
  %v238 = vpack.c.b16 %v188, %v187
  %v239 = vpack.c.b16 %v190, %v189
  %v240 = vpack.c.b16 %v192, %v191
  %v241 = vpack.c.b16 %v194, %v193
  %v242 = vpack.c.b16 %v196, %v195
  %v243 = vpack.c.b16 %v198, %v197
  %v244 = vpack.c.b16 %v200, %v199
  %v245 = vpack.c.b16 %v202, %v201
  %v246 = vpack.c.b16 %v204, %v203
  %v247 = vpack.c.b16 %v206, %v205
  %v248 = vpack.c.b16 %v208, %v207
  %v249 = vpack.c.b16 %v210, %v209
  %v250 = vpack.c.b16 %v212, %v211
  %v251 = vpack.c.b16 %v214, %v213
  %v252 = vpack.c.b16 %v216, %v215
  %v253 = vpack.c.b16 %v218, %v217
  %v254 = vpack.c.b16 %v220, %v219
  %v255 = vpack.c.b16 %v222, %v221
  %v256 = vpack.c.b16 %v224, %v223
  %v305 = vunpack.c.l.b16 %v81
  %v306 = vunpack.c.l.b16 %v82
  %v307 = vunpack.c.l.b16 %v83
  %v308 = vunpack.c.l.b16 %v84
  %v309 = vunpack.c.l.b16 %v85
  %v310 = vunpack.c.l.b16 %v86
  %v311 = vunpack.c.l.b16 %v87
  %v312 = vunpack.c.l.b16 %v88
  %v313 = vunpack.c.l.b16 %v89
  %v314 = vunpack.c.l.b16 %v90
  %v315 = vunpack.c.l.b16 %v91
  %v316 = vunpack.c.l.b16 %v92
  %v317 = vunpack.c.l.b16 %v93
  %v318 = vunpack.c.l.b16 %v94
  %v319 = vunpack.c.l.b16 %v95
  %v320 = vunpack.c.l.b16 %v96
  %v321 = vpack.c.b16 %v306, %v305
  %v322 = vpack.c.b16 %v308, %v307
  %v323 = vpack.c.b16 %v310, %v309
  %v324 = vpack.c.b16 %v312, %v311
  %v325 = vpack.c.b16 %v314, %v313
  %v326 = vpack.c.b16 %v316, %v315
  %v327 = vpack.c.b16 %v318, %v317
  %v328 = vpack.c.b16 %v320, %v319
  %337 = vmatpush.bf16.msra.mxu0 %v328
  %338 = vmatpush.bf16.msra.mxu0 %v327
  %339 = vmatpush.bf16.msra.mxu0 %v326
  %340 = vmatpush.bf16.msra.mxu0 %v325
  %341 = vmatpush.bf16.msra.mxu0 %v324
  %342 = vmatpush.bf16.msra.mxu0 %v323
  %343 = vmatpush.bf16.msra.mxu0 %v322
  %344 = vmatpush.bf16.msra.mxu0 %v321
  %345 = vmatmul.bf16.gmra.mxu0 %v225
  %v346 = vpop.f32.mrf.mxu0
  %v347 = vadd.f32 0.0, %v346
  %v348 = vpop.f32.mrf.mxu0
  %v349 = vadd.f32 0.0, %v348
  %350 = vmatmul.bf16.gmra.mxu0 %v226
  %v351 = vpop.f32.mrf.mxu0
  %v352 = vadd.f32 0.0, %v351
  %v353 = vpop.f32.mrf.mxu0
  %v354 = vadd.f32 0.0, %v353
  %355 = vmatmul.bf16.gmra.mxu0 %v227
  %v356 = vpop.f32.mrf.mxu0
  %v357 = vadd.f32 0.0, %v356
  %v358 = vpop.f32.mrf.mxu0
  %v359 = vadd.f32 0.0, %v358
  %360 = vmatmul.bf16.gmra.mxu0 %v228
  %v361 = vpop.f32.mrf.mxu0
  %v362 = vadd.f32 0.0, %v361
  %v363 = vpop.f32.mrf.mxu0
  %v364 = vadd.f32 0.0, %v363
  %365 = vmatmul.bf16.gmra.mxu0 %v229
  %v366 = vpop.f32.mrf.mxu0
  %v367 = vadd.f32 0.0, %v366
  %v368 = vpop.f32.mrf.mxu0
  %v369 = vadd.f32 0.0, %v368
  %370 = vmatmul.bf16.gmra.mxu0 %v230
  %v371 = vpop.f32.mrf.mxu0
  %v372 = vadd.f32 0.0, %v371
  %v373 = vpop.f32.mrf.mxu0
  %v374 = vadd.f32 0.0, %v373
  %375 = vmatmul.bf16.gmra.mxu0 %v231
  %v376 = vpop.f32.mrf.mxu0
  %v377 = vadd.f32 0.0, %v376
  %v378 = vpop.f32.mrf.mxu0
  %v379 = vadd.f32 0.0, %v378
  %380 = vmatmul.bf16.gmra.mxu0 %v232
  %v381 = vpop.f32.mrf.mxu0
  %v382 = vadd.f32 0.0, %v381
  %v383 = vpop.f32.mrf.mxu0
  %v384 = vadd.f32 0.0, %v383
  %385 = vmatmul.bf16.gmra.mxu0 %v233
  %v386 = vpop.f32.mrf.mxu0
  %v387 = vadd.f32 0.0, %v386
  %v388 = vpop.f32.mrf.mxu0
  %v389 = vadd.f32 0.0, %v388
  %390 = vmatmul.bf16.gmra.mxu0 %v234
  %v391 = vpop.f32.mrf.mxu0
  %v392 = vadd.f32 0.0, %v391
  %v393 = vpop.f32.mrf.mxu0
  %v394 = vadd.f32 0.0, %v393
  %395 = vmatmul.bf16.gmra.mxu0 %v235
  %v396 = vpop.f32.mrf.mxu0
  %v397 = vadd.f32 0.0, %v396
  %v398 = vpop.f32.mrf.mxu0
  %v399 = vadd.f32 0.0, %v398
  %400 = vmatmul.bf16.gmra.mxu0 %v236
  %v401 = vpop.f32.mrf.mxu0
  %v402 = vadd.f32 0.0, %v401
  %v403 = vpop.f32.mrf.mxu0
  %v404 = vadd.f32 0.0, %v403
  %405 = vmatmul.bf16.gmra.mxu0 %v237
  %v406 = vpop.f32.mrf.mxu0
  %v407 = vadd.f32 0.0, %v406
  %v408 = vpop.f32.mrf.mxu0
  %v409 = vadd.f32 0.0, %v408
  %410 = vmatmul.bf16.gmra.mxu0 %v238
  %v411 = vpop.f32.mrf.mxu0
  %v412 = vadd.f32 0.0, %v411
  %v413 = vpop.f32.mrf.mxu0
  %v414 = vadd.f32 0.0, %v413
  %415 = vmatmul.bf16.gmra.mxu0 %v239
  %v416 = vpop.f32.mrf.mxu0
  %v417 = vadd.f32 0.0, %v416
  %v418 = vpop.f32.mrf.mxu0
  %v419 = vadd.f32 0.0, %v418
  %420 = vmatmul.bf16.gmra.mxu0 %v240
  %v421 = vpop.f32.mrf.mxu0
  %v422 = vadd.f32 0.0, %v421
  %v423 = vpop.f32.mrf.mxu0
  %v424 = vadd.f32 0.0, %v423
  %425 = vmatmul.bf16.gmra.mxu0 %v241
  %v426 = vpop.f32.mrf.mxu0
  %v427 = vadd.f32 0.0, %v426
  %v428 = vpop.f32.mrf.mxu0
  %v429 = vadd.f32 0.0, %v428
  %430 = vmatmul.bf16.gmra.mxu0 %v242
  %v431 = vpop.f32.mrf.mxu0
  %v432 = vadd.f32 0.0, %v431
  %v433 = vpop.f32.mrf.mxu0
  %v434 = vadd.f32 0.0, %v433
  %435 = vmatmul.bf16.gmra.mxu0 %v243
  %v436 = vpop.f32.mrf.mxu0
  %v437 = vadd.f32 0.0, %v436
  %v438 = vpop.f32.mrf.mxu0
  %v439 = vadd.f32 0.0, %v438
  %440 = vmatmul.bf16.gmra.mxu0 %v244
  %v441 = vpop.f32.mrf.mxu0
  %v442 = vadd.f32 0.0, %v441
  %v443 = vpop.f32.mrf.mxu0
  %v444 = vadd.f32 0.0, %v443
  %445 = vmatmul.bf16.gmra.mxu0 %v245
  %v446 = vpop.f32.mrf.mxu0
  %v447 = vadd.f32 0.0, %v446
  %v448 = vpop.f32.mrf.mxu0
  %v449 = vadd.f32 0.0, %v448
  %450 = vmatmul.bf16.gmra.mxu0 %v246
  %v451 = vpop.f32.mrf.mxu0
  %v452 = vadd.f32 0.0, %v451
  %v453 = vpop.f32.mrf.mxu0
  %v454 = vadd.f32 0.0, %v453
  %455 = vmatmul.bf16.gmra.mxu0 %v247
  %v456 = vpop.f32.mrf.mxu0
  %v457 = vadd.f32 0.0, %v456
  %v458 = vpop.f32.mrf.mxu0
  %v459 = vadd.f32 0.0, %v458
  %460 = vmatmul.bf16.gmra.mxu0 %v248
  %v461 = vpop.f32.mrf.mxu0
  %v462 = vadd.f32 0.0, %v461
  %v463 = vpop.f32.mrf.mxu0
  %v464 = vadd.f32 0.0, %v463
  %465 = vmatmul.bf16.gmra.mxu0 %v249
  %v466 = vpop.f32.mrf.mxu0
  %v467 = vadd.f32 0.0, %v466
  %v468 = vpop.f32.mrf.mxu0
  %v469 = vadd.f32 0.0, %v468
  %470 = vmatmul.bf16.gmra.mxu0 %v250
  %v471 = vpop.f32.mrf.mxu0
  %v472 = vadd.f32 0.0, %v471
  %v473 = vpop.f32.mrf.mxu0
  %v474 = vadd.f32 0.0, %v473
  %475 = vmatmul.bf16.gmra.mxu0 %v251
  %v476 = vpop.f32.mrf.mxu0
  %v477 = vadd.f32 0.0, %v476
  %v478 = vpop.f32.mrf.mxu0
  %v479 = vadd.f32 0.0, %v478
  %480 = vmatmul.bf16.gmra.mxu0 %v252
  %v481 = vpop.f32.mrf.mxu0
  %v482 = vadd.f32 0.0, %v481
  %v483 = vpop.f32.mrf.mxu0
  %v484 = vadd.f32 0.0, %v483
  %485 = vmatmul.bf16.gmra.mxu0 %v253
  %v486 = vpop.f32.mrf.mxu0
  %v487 = vadd.f32 0.0, %v486
  %v488 = vpop.f32.mrf.mxu0
  %v489 = vadd.f32 0.0, %v488
  %490 = vmatmul.bf16.gmra.mxu0 %v254
  %v491 = vpop.f32.mrf.mxu0
  %v492 = vadd.f32 0.0, %v491
  %v493 = vpop.f32.mrf.mxu0
  %v494 = vadd.f32 0.0, %v493
  %495 = vmatmul.bf16.gmra.mxu0 %v255
  %v496 = vpop.f32.mrf.mxu0
  %v497 = vadd.f32 0.0, %v496
  %v498 = vpop.f32.mrf.mxu0
  %v499 = vadd.f32 0.0, %v498
  %500 = vmatmul.bf16.gmra.mxu0 %v256
  %v501 = vpop.f32.mrf.mxu0
  %v502 = vadd.f32 0.0, %v501
  %v503 = vpop.f32.mrf.mxu0
  %v504 = vadd.f32 0.0, %v503
  %505 = vdwg.mxu0
  %v506 = vld [vmem:[%s2] sm:$0x1]
  %v508 = vperm.slane %v506, 0
  %v510 = vmul.f32 %v347, %v508
  %v511 = vmul.f32 %v349, %v508
  %v512 = vmul.f32 %v352, %v508
  %v513 = vmul.f32 %v354, %v508
  %v514 = vmul.f32 %v357, %v508
  %v515 = vmul.f32 %v359, %v508
  %v516 = vmul.f32 %v362, %v508
  %v517 = vmul.f32 %v364, %v508
  %v518 = vmul.f32 %v367, %v508
  %v519 = vmul.f32 %v369, %v508
  %v520 = vmul.f32 %v372, %v508
  %v521 = vmul.f32 %v374, %v508
  %v522 = vmul.f32 %v377, %v508
  %v523 = vmul.f32 %v379, %v508
  %v524 = vmul.f32 %v382, %v508
  %v525 = vmul.f32 %v384, %v508
  %v526 = vmul.f32 %v387, %v508
  %v527 = vmul.f32 %v389, %v508
  %v528 = vmul.f32 %v392, %v508
  %v529 = vmul.f32 %v394, %v508
  %v530 = vmul.f32 %v397, %v508
  %v531 = vmul.f32 %v399, %v508
  %v532 = vmul.f32 %v402, %v508
  %v533 = vmul.f32 %v404, %v508
  %v534 = vmul.f32 %v407, %v508
  %v535 = vmul.f32 %v409, %v508
  %v536 = vmul.f32 %v412, %v508
  %v537 = vmul.f32 %v414, %v508
  %v538 = vmul.f32 %v417, %v508
  %v539 = vmul.f32 %v419, %v508
  %v540 = vmul.f32 %v422, %v508
  %v541 = vmul.f32 %v424, %v508
  %v542 = vmul.f32 %v427, %v508
  %v543 = vmul.f32 %v429, %v508
  %v544 = vmul.f32 %v432, %v508
  %v545 = vmul.f32 %v434, %v508
  %v546 = vmul.f32 %v437, %v508
  %v547 = vmul.f32 %v439, %v508
  %v548 = vmul.f32 %v442, %v508
  %v549 = vmul.f32 %v444, %v508
  %v550 = vmul.f32 %v447, %v508
  %v551 = vmul.f32 %v449, %v508
  %v552 = vmul.f32 %v452, %v508
  %v553 = vmul.f32 %v454, %v508
  %v554 = vmul.f32 %v457, %v508
  %v555 = vmul.f32 %v459, %v508
  %v556 = vmul.f32 %v462, %v508
  %v557 = vmul.f32 %v464, %v508
  %v558 = vmul.f32 %v467, %v508
  %v559 = vmul.f32 %v469, %v508
  %v560 = vmul.f32 %v472, %v508
  %v561 = vmul.f32 %v474, %v508
  %v562 = vmul.f32 %v477, %v508
  %v563 = vmul.f32 %v479, %v508
  %v564 = vmul.f32 %v482, %v508
  %v565 = vmul.f32 %v484, %v508
  %v566 = vmul.f32 %v487, %v508
  %v567 = vmul.f32 %v489, %v508
  %v568 = vmul.f32 %v492, %v508
  %v569 = vmul.f32 %v494, %v508
  %v570 = vmul.f32 %v497, %v508
  %v571 = vmul.f32 %v499, %v508
  %v572 = vmul.f32 %v502, %v508
  %v573 = vmul.f32 %v504, %v508
  %v574 = vld [vmem:[%s3] sm:$0x1]
  %v576 = vperm.slane %v574, 0
  %v578 = vadd.f32 %v510, %v576
  %v579 = vadd.f32 %v511, %v576
  %v580 = vadd.f32 %v512, %v576
  %v581 = vadd.f32 %v513, %v576
  %v582 = vadd.f32 %v514, %v576
  %v583 = vadd.f32 %v515, %v576
  %v584 = vadd.f32 %v516, %v576
  %v585 = vadd.f32 %v517, %v576
  %v586 = vadd.f32 %v518, %v576
  %v587 = vadd.f32 %v519, %v576
  %v588 = vadd.f32 %v520, %v576
  %v589 = vadd.f32 %v521, %v576
  %v590 = vadd.f32 %v522, %v576
  %v591 = vadd.f32 %v523, %v576
  %v592 = vadd.f32 %v524, %v576
  %v593 = vadd.f32 %v525, %v576
  %v594 = vadd.f32 %v526, %v576
  %v595 = vadd.f32 %v527, %v576
  %v596 = vadd.f32 %v528, %v576
  %v597 = vadd.f32 %v529, %v576
  %v598 = vadd.f32 %v530, %v576
  %v599 = vadd.f32 %v531, %v576
  %v600 = vadd.f32 %v532, %v576
  %v601 = vadd.f32 %v533, %v576
  %v602 = vadd.f32 %v534, %v576
  %v603 = vadd.f32 %v535, %v576
  %v604 = vadd.f32 %v536, %v576
  %v605 = vadd.f32 %v537, %v576
  %v606 = vadd.f32 %v538, %v576
  %v607 = vadd.f32 %v539, %v576
  %v608 = vadd.f32 %v540, %v576
  %v609 = vadd.f32 %v541, %v576
  %v610 = vadd.f32 %v542, %v576
  %v611 = vadd.f32 %v543, %v576
  %v612 = vadd.f32 %v544, %v576
  %v613 = vadd.f32 %v545, %v576
  %v614 = vadd.f32 %v546, %v576
  %v615 = vadd.f32 %v547, %v576
  %v616 = vadd.f32 %v548, %v576
  %v617 = vadd.f32 %v549, %v576
  %v618 = vadd.f32 %v550, %v576
  %v619 = vadd.f32 %v551, %v576
  %v620 = vadd.f32 %v552, %v576
  %v621 = vadd.f32 %v553, %v576
  %v622 = vadd.f32 %v554, %v576
  %v623 = vadd.f32 %v555, %v576
  %v624 = vadd.f32 %v556, %v576
  %v625 = vadd.f32 %v557, %v576
  %v626 = vadd.f32 %v558, %v576
  %v627 = vadd.f32 %v559, %v576
  %v628 = vadd.f32 %v560, %v576
  %v629 = vadd.f32 %v561, %v576
  %v630 = vadd.f32 %v562, %v576
  %v631 = vadd.f32 %v563, %v576
  %v632 = vadd.f32 %v564, %v576
  %v633 = vadd.f32 %v565, %v576
  %v634 = vadd.f32 %v566, %v576
  %v635 = vadd.f32 %v567, %v576
  %v636 = vadd.f32 %v568, %v576
  %v637 = vadd.f32 %v569, %v576
  %v638 = vadd.f32 %v570, %v576
  %v639 = vadd.f32 %v571, %v576
  %v640 = vadd.f32 %v572, %v576
  %v641 = vadd.f32 %v573, %v576
  %v642 = vmax.f32 %v578, 0.0
  %v643 = vmax.f32 %v579, 0.0
  %v644 = vmax.f32 %v580, 0.0
  %v645 = vmax.f32 %v581, 0.0
  %v646 = vmax.f32 %v582, 0.0
  %v647 = vmax.f32 %v583, 0.0
  %v648 = vmax.f32 %v584, 0.0
  %v649 = vmax.f32 %v585, 0.0
  %v650 = vmax.f32 %v586, 0.0
  %v651 = vmax.f32 %v587, 0.0
  %v652 = vmax.f32 %v588, 0.0
  %v653 = vmax.f32 %v589, 0.0
  %v654 = vmax.f32 %v590, 0.0
  %v655 = vmax.f32 %v591, 0.0
  %v656 = vmax.f32 %v592, 0.0
  %v657 = vmax.f32 %v593, 0.0
  %v658 = vmax.f32 %v594, 0.0
  %v659 = vmax.f32 %v595, 0.0
  %v660 = vmax.f32 %v596, 0.0
  %v661 = vmax.f32 %v597, 0.0
  %v662 = vmax.f32 %v598, 0.0
  %v663 = vmax.f32 %v599, 0.0
  %v664 = vmax.f32 %v600, 0.0
  %v665 = vmax.f32 %v601, 0.0
  %v666 = vmax.f32 %v602, 0.0
  %v667 = vmax.f32 %v603, 0.0
  %v668 = vmax.f32 %v604, 0.0
  %v669 = vmax.f32 %v605, 0.0
  %v670 = vmax.f32 %v606, 0.0
  %v671 = vmax.f32 %v607, 0.0
  %v672 = vmax.f32 %v608, 0.0
  %v673 = vmax.f32 %v609, 0.0
  %v674 = vmax.f32 %v610, 0.0
  %v675 = vmax.f32 %v611, 0.0
  %v676 = vmax.f32 %v612, 0.0
  %v677 = vmax.f32 %v613, 0.0
  %v678 = vmax.f32 %v614, 0.0
  %v679 = vmax.f32 %v615, 0.0
  %v680 = vmax.f32 %v616, 0.0
  %v681 = vmax.f32 %v617, 0.0
  %v682 = vmax.f32 %v618, 0.0
  %v683 = vmax.f32 %v619, 0.0
  %v684 = vmax.f32 %v620, 0.0
  %v685 = vmax.f32 %v621, 0.0
  %v686 = vmax.f32 %v622, 0.0
  %v687 = vmax.f32 %v623, 0.0
  %v688 = vmax.f32 %v624, 0.0
  %v689 = vmax.f32 %v625, 0.0
  %v690 = vmax.f32 %v626, 0.0
  %v691 = vmax.f32 %v627, 0.0
  %v692 = vmax.f32 %v628, 0.0
  %v693 = vmax.f32 %v629, 0.0
  %v694 = vmax.f32 %v630, 0.0
  %v695 = vmax.f32 %v631, 0.0
  %v696 = vmax.f32 %v632, 0.0
  %v697 = vmax.f32 %v633, 0.0
  %v698 = vmax.f32 %v634, 0.0
  %v699 = vmax.f32 %v635, 0.0
  %v700 = vmax.f32 %v636, 0.0
  %v701 = vmax.f32 %v637, 0.0
  %v702 = vmax.f32 %v638, 0.0
  %v703 = vmax.f32 %v639, 0.0
  %v704 = vmax.f32 %v640, 0.0
  %v705 = vmax.f32 %v641, 0.0
  %v706 = vpack.c.bf16 %v642, %v642
  %v707 = vpack.c.bf16 %v643, %v643
  %v708 = vpack.c.bf16 %v644, %v644
  %v709 = vpack.c.bf16 %v645, %v645
  %v710 = vpack.c.bf16 %v646, %v646
  %v711 = vpack.c.bf16 %v647, %v647
  %v712 = vpack.c.bf16 %v648, %v648
  %v713 = vpack.c.bf16 %v649, %v649
  %v714 = vpack.c.bf16 %v650, %v650
  %v715 = vpack.c.bf16 %v651, %v651
  %v716 = vpack.c.bf16 %v652, %v652
  %v717 = vpack.c.bf16 %v653, %v653
  %v718 = vpack.c.bf16 %v654, %v654
  %v719 = vpack.c.bf16 %v655, %v655
  %v720 = vpack.c.bf16 %v656, %v656
  %v721 = vpack.c.bf16 %v657, %v657
  %v722 = vpack.c.bf16 %v658, %v658
  %v723 = vpack.c.bf16 %v659, %v659
  %v724 = vpack.c.bf16 %v660, %v660
  %v725 = vpack.c.bf16 %v661, %v661
  %v726 = vpack.c.bf16 %v662, %v662
  %v727 = vpack.c.bf16 %v663, %v663
  %v728 = vpack.c.bf16 %v664, %v664
  %v729 = vpack.c.bf16 %v665, %v665
  %v730 = vpack.c.bf16 %v666, %v666
  %v731 = vpack.c.bf16 %v667, %v667
  %v732 = vpack.c.bf16 %v668, %v668
  %v733 = vpack.c.bf16 %v669, %v669
  %v734 = vpack.c.bf16 %v670, %v670
  %v735 = vpack.c.bf16 %v671, %v671
  %v736 = vpack.c.bf16 %v672, %v672
  %v737 = vpack.c.bf16 %v673, %v673
  %v738 = vpack.c.bf16 %v674, %v674
  %v739 = vpack.c.bf16 %v675, %v675
  %v740 = vpack.c.bf16 %v676, %v676
  %v741 = vpack.c.bf16 %v677, %v677
  %v742 = vpack.c.bf16 %v678, %v678
  %v743 = vpack.c.bf16 %v679, %v679
  %v744 = vpack.c.bf16 %v680, %v680
  %v745 = vpack.c.bf16 %v681, %v681
  %v746 = vpack.c.bf16 %v682, %v682
  %v747 = vpack.c.bf16 %v683, %v683
  %v748 = vpack.c.bf16 %v684, %v684
  %v749 = vpack.c.bf16 %v685, %v685
  %v750 = vpack.c.bf16 %v686, %v686
  %v751 = vpack.c.bf16 %v687, %v687
  %v752 = vpack.c.bf16 %v688, %v688
  %v753 = vpack.c.bf16 %v689, %v689
  %v754 = vpack.c.bf16 %v690, %v690
  %v755 = vpack.c.bf16 %v691, %v691
  %v756 = vpack.c.bf16 %v692, %v692
  %v757 = vpack.c.bf16 %v693, %v693
  %v758 = vpack.c.bf16 %v694, %v694
  %v759 = vpack.c.bf16 %v695, %v695
  %v760 = vpack.c.bf16 %v696, %v696
  %v761 = vpack.c.bf16 %v697, %v697
  %v762 = vpack.c.bf16 %v698, %v698
  %v763 = vpack.c.bf16 %v699, %v699
  %v764 = vpack.c.bf16 %v700, %v700
  %v765 = vpack.c.bf16 %v701, %v701
  %v766 = vpack.c.bf16 %v702, %v702
  %v767 = vpack.c.bf16 %v703, %v703
  %v768 = vpack.c.bf16 %v704, %v704
  %v769 = vpack.c.bf16 %v705, %v705
  %770 = vst [vmem:[%s4] sm:$0xf] %v706
  %771 = vst [vmem:[%s4 + $0x4] sm:$0xf] %v707
  %772 = vst [vmem:[%s4 + $0x8] sm:$0xf] %v708
  %773 = vst [vmem:[%s4 + $0xc] sm:$0xf] %v709
  %774 = vst [vmem:[%s4 + $0x10] sm:$0xf] %v710
  %775 = vst [vmem:[%s4 + $0x14] sm:$0xf] %v711
  %776 = vst [vmem:[%s4 + $0x18] sm:$0xf] %v712
  %777 = vst [vmem:[%s4 + $0x1c] sm:$0xf] %v713
  %778 = vst [vmem:[%s4 + $0x20] sm:$0xf] %v714
  %779 = vst [vmem:[%s4 + $0x24] sm:$0xf] %v715
  %780 = vst [vmem:[%s4 + $0x28] sm:$0xf] %v716
  %781 = vst [vmem:[%s4 + $0x2c] sm:$0xf] %v717
  %782 = vst [vmem:[%s4 + $0x30] sm:$0xf] %v718
  %783 = vst [vmem:[%s4 + $0x34] sm:$0xf] %v719
  %784 = vst [vmem:[%s4 + $0x38] sm:$0xf] %v720
  %785 = vst [vmem:[%s4 + $0x3c] sm:$0xf] %v721
  %786 = vst [vmem:[%s4 + $0x40] sm:$0xf] %v722
  %787 = vst [vmem:[%s4 + $0x44] sm:$0xf] %v723
  %788 = vst [vmem:[%s4 + $0x48] sm:$0xf] %v724
  %789 = vst [vmem:[%s4 + $0x4c] sm:$0xf] %v725
  %790 = vst [vmem:[%s4 + $0x50] sm:$0xf] %v726
  %791 = vst [vmem:[%s4 + $0x54] sm:$0xf] %v727
  %792 = vst [vmem:[%s4 + $0x58] sm:$0xf] %v728
  %793 = vst [vmem:[%s4 + $0x5c] sm:$0xf] %v729
  %794 = vst [vmem:[%s4 + $0x60] sm:$0xf] %v730
  %795 = vst [vmem:[%s4 + $0x64] sm:$0xf] %v731
  %796 = vst [vmem:[%s4 + $0x68] sm:$0xf] %v732
  %797 = vst [vmem:[%s4 + $0x6c] sm:$0xf] %v733
  %798 = vst [vmem:[%s4 + $0x70] sm:$0xf] %v734
  %799 = vst [vmem:[%s4 + $0x74] sm:$0xf] %v735
  %800 = vst [vmem:[%s4 + $0x78] sm:$0xf] %v736
  %801 = vst [vmem:[%s4 + $0x7c] sm:$0xf] %v737
  %802 = vst [vmem:[%s4 + $0x80] sm:$0xf] %v738
  %803 = vst [vmem:[%s4 + $0x84] sm:$0xf] %v739
  %804 = vst [vmem:[%s4 + $0x88] sm:$0xf] %v740
  %805 = vst [vmem:[%s4 + $0x8c] sm:$0xf] %v741
  %806 = vst [vmem:[%s4 + $0x90] sm:$0xf] %v742
  %807 = vst [vmem:[%s4 + $0x94] sm:$0xf] %v743
  %808 = vst [vmem:[%s4 + $0x98] sm:$0xf] %v744
  %809 = vst [vmem:[%s4 + $0x9c] sm:$0xf] %v745
  %810 = vst [vmem:[%s4 + $0xa0] sm:$0xf] %v746
  %811 = vst [vmem:[%s4 + $0xa4] sm:$0xf] %v747
  %812 = vst [vmem:[%s4 + $0xa8] sm:$0xf] %v748
  %813 = vst [vmem:[%s4 + $0xac] sm:$0xf] %v749
  %814 = vst [vmem:[%s4 + $0xb0] sm:$0xf] %v750
  %815 = vst [vmem:[%s4 + $0xb4] sm:$0xf] %v751
  %816 = vst [vmem:[%s4 + $0xb8] sm:$0xf] %v752
  %817 = vst [vmem:[%s4 + $0xbc] sm:$0xf] %v753
  %818 = vst [vmem:[%s4 + $0xc0] sm:$0xf] %v754
  %819 = vst [vmem:[%s4 + $0xc4] sm:$0xf] %v755
  %820 = vst [vmem:[%s4 + $0xc8] sm:$0xf] %v756
  %821 = vst [vmem:[%s4 + $0xcc] sm:$0xf] %v757
  %822 = vst [vmem:[%s4 + $0xd0] sm:$0xf] %v758
  %823 = vst [vmem:[%s4 + $0xd4] sm:$0xf] %v759
  %824 = vst [vmem:[%s4 + $0xd8] sm:$0xf] %v760
  %825 = vst [vmem:[%s4 + $0xdc] sm:$0xf] %v761
  %826 = vst [vmem:[%s4 + $0xe0] sm:$0xf] %v762
  %827 = vst [vmem:[%s4 + $0xe4] sm:$0xf] %v763
  %828 = vst [vmem:[%s4 + $0xe8] sm:$0xf] %v764
  %829 = vst [vmem:[%s4 + $0xec] sm:$0xf] %v765
  %830 = vst [vmem:[%s4 + $0xf0] sm:$0xf] %v766
  %831 = vst [vmem:[%s4 + $0xf4] sm:$0xf] %v767
  %832 = vst [vmem:[%s4 + $0xf8] sm:$0xf] %v768
  %833 = vst [vmem:[%s4 + $0xfc] sm:$0xf] %v769
  // Predicated region
  $region18: #{conv_bn_relu.1} parent=0 // pred_check
    _
  $region19: #{conv_bn_relu.1} parent=0 // pred_check_branch
    %835 = sbr.rel (0) target = $region21
  $region20: #{conv_bn_relu.1} parent=0 // pred_region
    _
  $region21: #{conv_bn_relu.1} parent=0 // pred_fallthru
    _
  // Predicated region
  $region22: #{conv_bn_relu.1} parent=0 // pred_check
    _
  $region23: #{conv_bn_relu.1} parent=0 // pred_check_branch
    %837 = sbr.rel (0) target = $region25
  $region24: #{conv_bn_relu.1} parent=0 // pred_region
    _
  $region25: #{conv_bn_relu.1} parent=0 // pred_fallthru
    _

</llo_original>
